<compile_context>
chip_gen: v7x
topology: tpu7x:2x2x1
jax: 0.10.0
libtpu: 0.0.40
codegen_flags: <defaults>
</compile_context>

<pallas_src>
import functools
import numpy as np

import jax
import jax.numpy as jnp
from jax.experimental import pallas as pl
from jax.experimental.pallas import tpu as pltpu


def _round_up(v, m):
    return ((v + m - 1) // m) * m


def _dims(C, L, H, K, S):
    assert H % 2 == 0, "pred_len must be even for the rfft/irfft matmul formulation"
    F = H // 2 + 1
    OD = F * (2 * K + 1)
    CH = _round_up(2 * OD, 128)            # padded [re | im] spectrum width
    SP = _round_up(S, 128)                 # padded state-logit width
    SEC0 = _round_up(L + C, 128)           # slab section 0: [x | one-hot channel | 0]
    SEC1 = _round_up((K + 1) * H + K, 128)  # slab section 1: [y_hat | leaders | r | 0]
    OUTW = _round_up(H, 128)               # lane-dense output width
    return dict(C=C, L=L, H=H, K=K, S=S, F=F, OD=OD, CH=CH, SP=SP,
                SEC0=SEC0, SEC1=SEC1, OUTW=OUTW)


# ----------------------------------------------------------------------------
# Pallas kernel: LeadRefiner forward for a block of RB = (batch*channel) rows.
# ----------------------------------------------------------------------------
def _lead_refiner_kernel(inv_t_ref,                       # SMEM (1,) = 1/temperature
                         slab_ref,                        # (RB, SEC0+SEC1) packed rows
                         wbig_ref, whead_ref, wout_ref, bout_ref,   # fused weights
                         out_ref, *, L, H, K, SP, CH, SEC0, OUTW):
    slab = slab_ref[...]                                  # (RB, SEC0+SEC1)

    # ---- instance_norm stats over x (lanes 0..L-1 of section 0) -------------
    # Section 0 = [x | one-hot channel | zeros]; the one-hot contributes exactly
    # 1.0 to both the sum and the sum of squares, so subtract 1 and divide by L.
    sec0 = slab[:, :SEC0]
    inv_L = 1.0 / L
    mu = (jnp.sum(sec0, axis=-1, keepdims=True) - 1.0) * inv_L
    ex2 = (jnp.sum(sec0 * sec0, axis=-1, keepdims=True) - 1.0) * inv_L
    var = jnp.maximum(ex2 - mu * mu, 0.0)
    std = jnp.sqrt(var + 1e-8)
    inv_std = 1.0 / std

    # Normalize only the y_hat lanes of the slab (full-vreg select, no lane shifts);
    # the leader sequences arrive already normalized from the no-grad gather.
    lane = jax.lax.broadcasted_iota(jnp.int32, slab.shape, 1)
    is_yh = jnp.logical_and(lane >= SEC0, lane < SEC0 + H)
    slab_n = jnp.where(is_yh, (slab - mu) * inv_std, slab)

    # ---- MXU push 1: [state logits | rfft spectrum] in one block matmul ------
    big = jnp.dot(slab_n, wbig_ref[...], preferred_element_type=jnp.float32)
    logits = big[:, :SP]                                   # (RB, SP)  (-1e9 in pad lanes)
    spec = big[:, SP:SP + CH]                              # (RB, CH)  [re | im | 0]

    # state softmax (pad lanes hold -1e9 -> exp underflows to exactly 0)
    pm = jnp.max(logits, axis=-1, keepdims=True)
    pe = jnp.exp(logits - pm)
    p = pe * (1.0 / jnp.sum(pe, axis=-1, keepdims=True))   # (RB, SP)

    # ---- r = softmax(cat([1, |r|], -1) / T, -1)[..., 1:] ---------------------
    inv_t = inv_t_ref[0]
    roff = SEC0 + (K + 1) * H
    la = jnp.abs(slab[:, roff:roff + K]) * inv_t           # (RB, K)
    cm = jnp.maximum(jnp.max(la, axis=-1, keepdims=True), inv_t)
    ea = jnp.exp(la - cm)
    corr = ea * (1.0 / (jnp.exp(inv_t - cm) + jnp.sum(ea, axis=-1, keepdims=True)))

    # ---- MXU push 2: fused mix-head -> duplicated [filt | filt] chunks --------
    m2 = jnp.dot(p, whead_ref[...], preferred_element_type=jnp.float32)  # (RB, (K+1)*CH)
    filt2 = m2[:, :CH]
    for k in range(K):
        filt2 = filt2 + corr[:, k:k + 1] * m2[:, (k + 1) * CH:(k + 2) * CH]

    prod = spec * filt2                                     # (RB, CH)

    # ---- MXU push 3: complex mix_layer + leader-sum + irfft (folded host-side)
    delta = (jnp.dot(prod, wout_ref[...], preferred_element_type=jnp.float32)
             + bout_ref[...])                               # (RB, OUTW), lanes >= H are 0

    # out = y_hat + delta*std  (== (y_hat_norm + delta)*std + mu).  Section 1 holds
    # raw y_hat in lanes 0..H-1; lanes >= H carry discarded padding/garbage.
    out_ref[...] = slab[:, SEC0:SEC0 + OUTW] + delta * std


# ----------------------------------------------------------------------------
# pallas_call wrapper (rows = B*C, one or more row-blocks as grid steps)
# ----------------------------------------------------------------------------
def lead_refiner_pallas(slab, fused):
    d = fused["dims"]
    L, H, K = d["L"], d["H"], d["K"]
    SP, CH, SEC0, OUTW = d["SP"], d["CH"], d["SEC0"], d["OUTW"]
    R, SLABW = slab.shape

    # Row block: fill sublanes (multiple of 8), cap at 256 so large batches become
    # several 'parallel' grid steps (feeds both v7x TCs; 256 rows fill the v6e MXU).
    RB = min(256, _round_up(R, 8))
    R_pad = _round_up(R, RB)
    if R_pad != R:
        slab = jnp.pad(slab, ((0, R_pad - R), (0, 0)))

    kern = functools.partial(_lead_refiner_kernel, L=L, H=H, K=K,
                             SP=SP, CH=CH, SEC0=SEC0, OUTW=OUTW)

    out = pl.pallas_call(
        kern,
        out_shape=jax.ShapeDtypeStruct((R_pad, OUTW), jnp.float32),
        grid_spec=pltpu.PrefetchScalarGridSpec(
            num_scalar_prefetch=0,
            grid=(R_pad // RB,),
            in_specs=[
                pl.BlockSpec(memory_space=pltpu.MemorySpace.SMEM),   # 1/temperature
                pl.BlockSpec((RB, SLABW), lambda i: (i, 0)),          # packed row slab
                pl.BlockSpec(fused["w_big"].shape, lambda i: (0, 0)),
                pl.BlockSpec(fused["w_head2"].shape, lambda i: (0, 0)),
                pl.BlockSpec(fused["w_out"].shape, lambda i: (0, 0)),
                pl.BlockSpec(fused["b_out"].shape, lambda i: (0, 0)),
            ],
            out_specs=pl.BlockSpec((RB, OUTW), lambda i: (i, 0))),
        compiler_params=pltpu.CompilerParams(dimension_semantics=("parallel",)),
    )(fused["inv_temp"], slab, fused["w_big"], fused["w_head2"],
      fused["w_out"], fused["b_out"])
    return out[:R, :H]


# ----------------------------------------------------------------------------
# Deterministic logical parameter init (shapes taken from the module's __init__)
# ----------------------------------------------------------------------------
def init_params(key, C, L, H, K, S, temperature=1.0):
    F = H // 2 + 1
    OD = F * (2 * K + 1)
    ks = jax.random.split(key, 9)

    def u(k, shape, bound):
        return jax.random.uniform(k, shape, jnp.float32, minval=-bound, maxval=bound)

    prm = {}
    prm["temperature"] = jnp.full((1, 1), temperature, jnp.float32)
    prm["cls_w"] = u(ks[0], (L, S), 1.0 / np.sqrt(L))                 # classifier weight^T
    prm["basic_state"] = u(ks[1], (C, S), 1.0 / np.sqrt(S))
    prm["state_bias"] = u(ks[2], (1, S), 1.0 / np.sqrt(L))
    prm["mix_head_w"] = u(ks[3], (S, K * OD), 1.0 / np.sqrt(K))
    prm["mix_head_b"] = u(ks[4], (S, OD), 1.0 / np.sqrt(K))
    bm = 1.0 / np.sqrt(3 * F)
    prm["mix_wr"] = u(ks[5], (3 * F, F), bm).reshape(3, F, F)         # complex W^T real
    prm["mix_wi"] = u(ks[6], (3 * F, F), bm).reshape(3, F, F)         # complex W^T imag
    prm["mix_br"] = u(ks[7], (1, F), bm)
    prm["mix_bi"] = u(ks[8], (1, F), bm)

    # rfft / irfft as real matmuls (H even); irfft ignores imag of DC/Nyquist bins
    # automatically because sin(0)=sin(pi*t)=0 there (matches torch.fft.irfft).
    n = np.arange(H)[:, None].astype(np.float64)
    f = np.arange(F)[None, :].astype(np.float64)
    ang = 2.0 * np.pi * n * f / H
    prm["dft_cos"] = jnp.asarray(np.cos(ang), jnp.float32)            # (H, F)
    prm["dft_sin"] = jnp.asarray(-np.sin(ang), jnp.float32)           # (H, F)
    w = np.full((F, 1), 2.0)
    w[0, 0] = 1.0
    w[-1, 0] = 1.0
    kk = np.arange(F)[:, None].astype(np.float64)
    nn = np.arange(H)[None, :].astype(np.float64)
    ang2 = 2.0 * np.pi * kk * nn / H
    prm["inv_cos"] = jnp.asarray(w * np.cos(ang2) / H, jnp.float32)   # (F, H)
    prm["inv_sin"] = jnp.asarray(-w * np.sin(ang2) / H, jnp.float32)  # (F, H)
    return prm


# ----------------------------------------------------------------------------
# Host-side weight fusion / repacking for the kernel
# ----------------------------------------------------------------------------
def fuse_params(prm, C, L, H, K, S):
    d = _dims(C, L, H, K, S)
    F, OD, CH, SP = d["F"], d["OD"], d["CH"], d["SP"]
    SEC0, SEC1, OUTW = d["SEC0"], d["SEC1"], d["OUTW"]
    nC = 2 * K + 1
    NEG = jnp.float32(-1e9)

    # --- W_big: one block matmul producing [state logits | rfft spectrum].
    #   rows 0..L-1        : classifier weight (x lanes)           -> logit cols
    #   rows L..L+C-1      : state_bias + basic_state via one-hot  -> logit cols (+ -1e9 pad)
    #   rows SEC0..+H      : d_self   (normalized y_hat lanes)     -> spectrum cols
    #   rows SEC0+H+k*H..  : d_lead_k (leader-k lanes)             -> spectrum cols
    table = prm["state_bias"] + prm["basic_state"]                          # (C, S)
    cls_blk = jnp.pad(prm["cls_w"], ((0, 0), (0, SP - S)))                  # (L, SP)
    tbl_blk = jnp.concatenate([table, jnp.full((C, SP - S), NEG, jnp.float32)], axis=1)
    top_left = jnp.concatenate(
        [cls_blk, tbl_blk, jnp.zeros((SEC0 - L - C, SP), jnp.float32)], axis=0)

    dcos, dsin = prm["dft_cos"], prm["dft_sin"]                             # (H, F)
    zl = jnp.zeros((H, F), jnp.float32)

    def lead_rows(k):
        r_c = [dcos if (c == k or c == K + k) else zl for c in range(nC)]
        i_c = [dsin if (c == k or c == K + k) else zl for c in range(nC)]
        return jnp.concatenate(r_c + i_c, axis=1)                           # (H, 2*OD)

    r_c = [(-dcos) if (K <= c < 2 * K) else (dcos if c == 2 * K else zl) for c in range(nC)]
    i_c = [(-dsin) if (K <= c < 2 * K) else (dsin if c == 2 * K else zl) for c in range(nC)]
    d_self = jnp.concatenate(r_c + i_c, axis=1)                             # (H, 2*OD)
    d_lead = jnp.concatenate([lead_rows(k) for k in range(K)], axis=0)      # (K*H, 2*OD)
    dft = jnp.concatenate(
        [d_self, d_lead, jnp.zeros((SEC1 - (K + 1) * H, 2 * OD), jnp.float32)], axis=0)
    dft = jnp.pad(dft, ((0, 0), (0, CH - 2 * OD)))                          # (SEC1, CH)

    w_big = jnp.concatenate(
        [jnp.concatenate([top_left, jnp.zeros((SEC0, CH), jnp.float32)], axis=1),
         jnp.concatenate([jnp.zeros((SEC1, SP), jnp.float32), dft], axis=1)], axis=0)

    # --- fused mix-head: [bias | w_0 | ... | w_{K-1}], each chunk duplicated (re/im)
    #     and padded to a 128-lane boundary; rows padded to the padded state width.
    mhw, mhb = prm["mix_head_w"], prm["mix_head_b"]
    chunks = [mhb] + [mhw[:, k * OD:(k + 1) * OD] for k in range(K)]

    def dup_pad(c):
        dd = jnp.concatenate([c, c], axis=1)                                # (S, 2*OD)
        return jnp.pad(dd, ((0, 0), (0, CH - 2 * OD)))
    w_head2 = jnp.concatenate([dup_pad(c) for c in chunks], axis=1)         # (S, (K+1)*CH)
    w_head2 = jnp.pad(w_head2, ((0, SP - S), (0, 0)))                       # (SP, (K+1)*CH)

    # --- complex mix_layer folded with the leader-sum and the inverse DFT -------
    wr, wi = prm["mix_wr"], prm["mix_wi"]

    def part(c):
        return 0 if c < K else (1 if c < 2 * K else 2)
    wr_big = jnp.concatenate([wr[part(c)] for c in range(nC)], axis=0)      # (OD, F)
    wi_big = jnp.concatenate([wi[part(c)] for c in range(nC)], axis=0)
    w_mix_big = jnp.concatenate(
        [jnp.concatenate([wr_big, wi_big], axis=1),
         jnp.concatenate([-wi_big, wr_big], axis=1)], axis=0)               # (2*OD, 2*F)
    b_cat = jnp.concatenate([prm["mix_br"], prm["mix_bi"]], axis=1)         # (1, 2*F)
    inv_stack = jnp.concatenate([prm["inv_cos"], prm["inv_sin"]], axis=0)   # (2*F, H)

    w_out = jnp.pad(jnp.dot(w_mix_big, inv_stack),
                    ((0, CH - 2 * OD), (0, OUTW - H)))                      # (CH, OUTW)
    b_out = jnp.pad(jnp.dot(b_cat, inv_stack), ((0, 0), (0, OUTW - H)))     # (1, OUTW)

    inv_temp = (1.0 / prm["temperature"]).reshape(1).astype(jnp.float32)    # SMEM scalar

    return dict(w_big=w_big, w_head2=w_head2, w_out=w_out, b_out=b_out,
                inv_temp=inv_temp, dims=d)


# ----------------------------------------------------------------------------
# Plain-JAX glue: backbone + shifted_leader_seq surrogate (no-grad gather)
# ----------------------------------------------------------------------------
def prepare_inputs(x_blc, w_backbone, K):
    B, L, C = x_blc.shape
    # backbone is an external module in the reference; deterministic shared linear L -> H.
    y_hat_bhc = jnp.einsum('hl,blc->bhc', w_backbone, x_blc)                # (B, H, C)

    x_bcl = jnp.transpose(x_blc, (0, 2, 1))                                 # (B, C, L)
    yh_bch = jnp.transpose(y_hat_bhc, (0, 2, 1))                            # (B, C, H)

    # instance norm here only to build the no-grad leader gather; the kernel recomputes it.
    mu = x_bcl.mean(-1, keepdims=True)
    xc = x_bcl - mu
    std = jnp.sqrt((xc * xc).mean(-1, keepdims=True) + 1e-8)
    xn = xc / std
    yhn = (yh_bch - mu) / std

    # TODO(synk): `shifted_leader_seq` source is not provided; deterministic surrogate:
    # leader k of channel c is channel (c+k+1) % C with zero shift (trunc_tail=0 -> the
    # gathered window is the leader's normalized prediction), r = lag-0 correlation.
    leader_ids = (jnp.arange(C)[:, None] + jnp.arange(1, K + 1)[None, :]) % C   # (C, K)
    seq_shifted = yhn[:, leader_ids, :]                                     # (B, C, K, H)
    x_lead = xn[:, leader_ids, :]                                           # (B, C, K, L)
    r = jnp.mean(xn[:, :, None, :] * x_lead, axis=-1)                       # (B, C, K)
    return x_bcl, yh_bch, seq_shifted, r


def build_row_slab(x_bcl, yh_bch, seq_bckh, r, d):
    B, C, L = x_bcl.shape
    H, K = d["H"], d["K"]
    SEC0, SEC1 = d["SEC0"], d["SEC1"]
    R = B * C
    x_rows = x_bcl.reshape(R, L)
    yh_rows = yh_bch.reshape(R, H)
    seq_rows = seq_bckh.reshape(R, K * H)
    r_rows = r.reshape(R, K)
    onehot = jnp.tile(jnp.eye(C, dtype=jnp.float32), (B, 1))                # row b*C+c -> e_c
    sec0 = jnp.concatenate(
        [x_rows, onehot, jnp.zeros((R, SEC0 - L - C), jnp.float32)], axis=1)
    sec1 = jnp.concatenate(
        [yh_rows, seq_rows, r_rows,
         jnp.zeros((R, SEC1 - (K + 1) * H - K), jnp.float32)], axis=1)
    return jnp.concatenate([sec0, sec1], axis=1)                            # (R, SEC0+SEC1)


def model_forward(x_blc, w_backbone, fused, K):
    B, L, C = x_blc.shape
    d = fused["dims"]
    x_bcl, yh_bch, seq_bckh, r = prepare_inputs(x_blc, w_backbone, K)
    slab = build_row_slab(x_bcl, yh_bch, seq_bckh, r, d)
    out_rows = lead_refiner_pallas(slab, fused)                             # (B*C, H)
    out_bch = out_rows.reshape(B, C, d["H"])
    return jnp.transpose(out_bch, (0, 2, 1))                                # (B, H, C)


# ----------------------------------------------------------------------------
# Pure-JAX mirror of the (unfused) module math using jnp.fft, for verification
# ----------------------------------------------------------------------------
def lead_refiner_reference(x, yh, seq, r_raw, prm, K):
    H = yh.shape[-1]
    F = H // 2 + 1
    OD = F * (2 * K + 1)
    mu = x.mean(-1, keepdims=True)
    xc = x - mu
    std = jnp.sqrt((xc * xc).mean(-1, keepdims=True) + 1e-8)
    yhn = (yh - mu) / std
    temp = prm["temperature"][0, 0]
    ones = jnp.ones(r_raw.shape[:-1] + (1,), jnp.float32)
    rs = jax.nn.softmax(jnp.concatenate([ones, jnp.abs(r_raw)], -1) / temp, -1)
    corr = rs[..., 1:]
    cls = jnp.einsum('bcl,ls->bcs', x, prm["cls_w"])
    p = jax.nn.softmax(prm["state_bias"] + prm["basic_state"] + cls, -1)
    w_mix = jnp.einsum('bcs,sd->bcd', p, prm["mix_head_w"])
    filt = jnp.einsum('bcs,sd->bcd', p, prm["mix_head_b"])
    for k in range(K):
        filt = filt + corr[..., k:k + 1] * w_mix[..., k * OD:(k + 1) * OD]
    filt = filt.reshape(filt.shape[:-1] + (2 * K + 1, F))
    yf = jnp.fft.rfft(yhn)                                                  # (B, C, F)
    sf = jnp.fft.rfft(seq)                                                  # (B, C, K, F)
    ss = (sf * filt[..., :K, :]).sum(-2)
    sd = ((sf - yf[..., None, :]) * filt[..., K:2 * K, :]).sum(-2)
    yy = yf * filt[..., 2 * K, :]
    mix_in = jnp.concatenate([ss, sd, yy], -1)                              # (B, C, 3F) complex
    w_t = (prm["mix_wr"].reshape(3 * F, F)
           + 1j * prm["mix_wi"].reshape(3 * F, F)).astype(jnp.complex64)
    b = (prm["mix_br"] + 1j * prm["mix_bi"]).astype(jnp.complex64)
    out_c = mix_in @ w_t + b
    delta = jnp.fft.irfft(out_c, n=H)
    return (yhn + delta) * std + mu


# ----------------------------------------------------------------------------
if __name__ == "__main__":
    # configs: seq_len=32, pred_len=16, enc_in*in_dim=4 channels, leader_num=2,
    # state_num=4, temperature=1.0, trunc_tail=0, decom=False, seg=False.
    B, C, L, H, K, S = 2, 4, 32, 16, 2, 4

    key = jax.random.PRNGKey(0)
    kx, kb, kp = jax.random.split(key, 3)
    x = jax.random.normal(kx, (B, L, C), jnp.float32)                       # PyTorch layout (B, L, C)
    w_backbone = jax.random.normal(kb, (H, L), jnp.float32) / np.sqrt(L)    # deterministic backbone
    prm = init_params(kp, C, L, H, K, S, temperature=1.0)
    fused = fuse_params(prm, C, L, H, K, S)

    out = model_forward(x, w_backbone, fused, K)                            # (B, H, C)
    out = jax.block_until_ready(out)
    assert out.shape == (B, H, C)

    # verify the fused Pallas kernel against the unfused pure-JAX (jnp.fft) mirror
    x_bcl, yh_bch, seq_bckh, r = prepare_inputs(x, w_backbone, K)
    ref = jnp.transpose(lead_refiner_reference(x_bcl, yh_bch, seq_bckh, r, prm, K), (0, 2, 1))
    np.testing.assert_allclose(np.asarray(out), np.asarray(ref), rtol=2e-3, atol=2e-3)

    print("KERNEL_OK")
</pallas_src>

<mosaic_0001>
module attributes {stable_mosaic.version = 11 : i64} {
  func.func @_lead_refiner_kernel(%arg0: i32, %arg1: memref<1xf32, #tpu.memory_space<smem>>, %arg2: memref<8x256xf32, #tpu.memory_space<vmem>>, %arg3: memref<256x256xf32, #tpu.memory_space<vmem>>, %arg4: memref<128x384xf32, #tpu.memory_space<vmem>>, %arg5: memref<128x128xf32, #tpu.memory_space<vmem>>, %arg6: memref<1x128xf32, #tpu.memory_space<vmem>>, %arg7: memref<8x128xf32, #tpu.memory_space<vmem>>) attributes {dimension_semantics = [#tpu.dimension_semantics<parallel>], iteration_bounds = array<i64: 1>, scalar_prefetch = 0 : i64, scratch_operands = 0 : i64, tpu.core_type = #tpu.core_type<tc>, window_params = [{transform_indices = @transform_0, window_bounds = array<i64: 1>}, {transform_indices = @transform_1, window_bounds = array<i64: 8, 256>}, {pipeline_mode = #tpu.pipeline_mode<synchronous>, transform_indices = @transform_2, window_bounds = array<i64: 256, 256>}, {pipeline_mode = #tpu.pipeline_mode<synchronous>, transform_indices = @transform_3, window_bounds = array<i64: 128, 384>}, {pipeline_mode = #tpu.pipeline_mode<synchronous>, transform_indices = @transform_4, window_bounds = array<i64: 128, 128>}, {pipeline_mode = #tpu.pipeline_mode<synchronous>, transform_indices = @transform_5, window_bounds = array<i64: 1, 128>}, {transform_indices = @transform_6, window_bounds = array<i64: 8, 128>}]} {
    %c0 = arith.constant 0 : index
    %c0_0 = arith.constant 0 : index
    %0 = vector.load %arg2[%c0, %c0_0] : memref<8x256xf32, #tpu.memory_space<vmem>>, vector<8x256xf32>
    %1 = vector.extract_strided_slice %0 {offsets = [0, 0], sizes = [8, 128], strides = [1, 1]} : vector<8x256xf32> to vector<8x128xf32>
    %cst = arith.constant dense<0.000000e+00> : vector<8xf32>
    %2 = vector.multi_reduction <add>, %1, %cst [1] : vector<8x128xf32> to vector<8xf32>
    %3 = vector.shape_cast %2 : vector<8xf32> to vector<8x1xf32>
    %cst_1 = arith.constant 1.000000e+00 : f32
    %4 = vector.broadcast %cst_1 : f32 to vector<8x1xf32>
    %5 = arith.subf %3, %4 : vector<8x1xf32>
    %cst_2 = arith.constant 3.125000e-02 : f32
    %6 = vector.broadcast %cst_2 : f32 to vector<8x1xf32>
    %7 = arith.mulf %5, %6 : vector<8x1xf32>
    %8 = arith.mulf %1, %1 : vector<8x128xf32>
    %cst_3 = arith.constant dense<0.000000e+00> : vector<8xf32>
    %9 = vector.multi_reduction <add>, %8, %cst_3 [1] : vector<8x128xf32> to vector<8xf32>
    %10 = vector.shape_cast %9 : vector<8xf32> to vector<8x1xf32>
    %cst_4 = arith.constant 1.000000e+00 : f32
    %11 = vector.broadcast %cst_4 : f32 to vector<8x1xf32>
    %12 = arith.subf %10, %11 : vector<8x1xf32>
    %cst_5 = arith.constant 3.125000e-02 : f32
    %13 = vector.broadcast %cst_5 : f32 to vector<8x1xf32>
    %14 = arith.mulf %12, %13 : vector<8x1xf32>
    %15 = arith.mulf %7, %7 : vector<8x1xf32>
    %16 = arith.subf %14, %15 : vector<8x1xf32>
    %cst_6 = arith.constant 0.000000e+00 : f32
    %17 = vector.broadcast %cst_6 : f32 to vector<8x1xf32>
    %18 = arith.maximumf %16, %17 : vector<8x1xf32>
    %cst_7 = arith.constant 9.99999993E-9 : f32
    %19 = vector.broadcast %cst_7 : f32 to vector<8x1xf32>
    %20 = arith.addf %18, %19 : vector<8x1xf32>
    %21 = math.sqrt %20 : vector<8x1xf32>
    %cst_8 = arith.constant 1.000000e+00 : f32
    %22 = vector.broadcast %cst_8 : f32 to vector<8x1xf32>
    %23 = arith.divf %22, %21 : vector<8x1xf32>
    %24 = tpu.iota {dimensions = array<i32: 1>} : vector<8x256xi32>
    %c128_i32 = arith.constant 128 : i32
    %25 = vector.broadcast %c128_i32 : i32 to vector<8x256xi32>
    %26 = arith.cmpi sge, %24, %25 : vector<8x256xi32>
    %c144_i32 = arith.constant 144 : i32
    %27 = vector.broadcast %c144_i32 : i32 to vector<8x256xi32>
    %28 = arith.cmpi slt, %24, %27 : vector<8x256xi32>
    %29 = arith.andi %26, %28 : vector<8x256xi1>
    %30 = vector.broadcast %7 : vector<8x1xf32> to vector<8x256xf32>
    %31 = arith.subf %0, %30 : vector<8x256xf32>
    %32 = vector.broadcast %23 : vector<8x1xf32> to vector<8x256xf32>
    %33 = arith.mulf %31, %32 : vector<8x256xf32>
    %34 = arith.select %29, %33, %0 : vector<8x256xi1>, vector<8x256xf32>
    %c0_9 = arith.constant 0 : index
    %c0_10 = arith.constant 0 : index
    %35 = vector.load %arg3[%c0_9, %c0_10] : memref<256x256xf32, #tpu.memory_space<vmem>>, vector<256x256xf32>
    %cst_11 = arith.constant dense<0.000000e+00> : vector<8x256xf32>
    %36 = tpu.matmul %34, %35, %cst_11 {dimension_numbers = #tpu.dot_dimension_numbers<[1], [0], [0], [1], [0, 0, 1, 1], [], []>} : vector<8x256xf32>, vector<256x256xf32>, vector<8x256xf32> -> vector<8x256xf32>
    %37 = vector.extract_strided_slice %36 {offsets = [0, 0], sizes = [8, 128], strides = [1, 1]} : vector<8x256xf32> to vector<8x128xf32>
    %38 = vector.extract_strided_slice %36 {offsets = [0, 128], sizes = [8, 128], strides = [1, 1]} : vector<8x256xf32> to vector<8x128xf32>
    %cst_12 = arith.constant dense<0xFF800000> : vector<8xf32>
    %39 = vector.multi_reduction <maximumf>, %37, %cst_12 [1] : vector<8x128xf32> to vector<8xf32>
    %40 = vector.shape_cast %39 : vector<8xf32> to vector<8x1xf32>
    %41 = vector.broadcast %40 : vector<8x1xf32> to vector<8x128xf32>
    %42 = arith.subf %37, %41 : vector<8x128xf32>
    %43 = math.exp %42 : vector<8x128xf32>
    %cst_13 = arith.constant dense<0.000000e+00> : vector<8xf32>
    %44 = vector.multi_reduction <add>, %43, %cst_13 [1] : vector<8x128xf32> to vector<8xf32>
    %45 = vector.shape_cast %44 : vector<8xf32> to vector<8x1xf32>
    %cst_14 = arith.constant 1.000000e+00 : f32
    %46 = vector.broadcast %cst_14 : f32 to vector<8x1xf32>
    %47 = arith.divf %46, %45 : vector<8x1xf32>
    %48 = vector.broadcast %47 : vector<8x1xf32> to vector<8x128xf32>
    %49 = arith.mulf %43, %48 : vector<8x128xf32>
    %c0_15 = arith.constant 0 : index
    %50 = memref.load %arg1[%c0_15] : memref<1xf32, #tpu.memory_space<smem>>
    %51 = vector.extract_strided_slice %0 {offsets = [0, 176], sizes = [8, 2], strides = [1, 1]} : vector<8x256xf32> to vector<8x2xf32>
    %52 = math.absf %51 : vector<8x2xf32>
    %53 = vector.broadcast %50 : f32 to vector<8x2xf32>
    %54 = arith.mulf %52, %53 : vector<8x2xf32>
    %cst_16 = arith.constant dense<0xFF800000> : vector<8xf32>
    %55 = vector.multi_reduction <maximumf>, %54, %cst_16 [1] : vector<8x2xf32> to vector<8xf32>
    %56 = vector.shape_cast %55 : vector<8xf32> to vector<8x1xf32>
    %57 = vector.broadcast %50 : f32 to vector<8x1xf32>
    %58 = arith.maximumf %56, %57 : vector<8x1xf32>
    %59 = vector.broadcast %58 : vector<8x1xf32> to vector<8x2xf32>
    %60 = arith.subf %54, %59 : vector<8x2xf32>
    %61 = math.exp %60 : vector<8x2xf32>
    %62 = vector.broadcast %50 : f32 to vector<8x1xf32>
    %63 = arith.subf %62, %58 : vector<8x1xf32>
    %64 = math.exp %63 : vector<8x1xf32>
    %cst_17 = arith.constant dense<0.000000e+00> : vector<8xf32>
    %65 = vector.multi_reduction <add>, %61, %cst_17 [1] : vector<8x2xf32> to vector<8xf32>
    %66 = vector.shape_cast %65 : vector<8xf32> to vector<8x1xf32>
    %67 = arith.addf %64, %66 : vector<8x1xf32>
    %cst_18 = arith.constant 1.000000e+00 : f32
    %68 = vector.broadcast %cst_18 : f32 to vector<8x1xf32>
    %69 = arith.divf %68, %67 : vector<8x1xf32>
    %70 = vector.broadcast %69 : vector<8x1xf32> to vector<8x2xf32>
    %71 = arith.mulf %61, %70 : vector<8x2xf32>
    %c0_19 = arith.constant 0 : index
    %c0_20 = arith.constant 0 : index
    %72 = vector.load %arg4[%c0_19, %c0_20] : memref<128x384xf32, #tpu.memory_space<vmem>>, vector<128x384xf32>
    %cst_21 = arith.constant dense<0.000000e+00> : vector<8x384xf32>
    %73 = tpu.matmul %49, %72, %cst_21 {dimension_numbers = #tpu.dot_dimension_numbers<[1], [0], [0], [1], [0, 0, 1, 1], [], []>} : vector<8x128xf32>, vector<128x384xf32>, vector<8x384xf32> -> vector<8x384xf32>
    %74 = vector.extract_strided_slice %73 {offsets = [0, 0], sizes = [8, 128], strides = [1, 1]} : vector<8x384xf32> to vector<8x128xf32>
    %75 = vector.extract_strided_slice %71 {offsets = [0, 0], sizes = [8, 1], strides = [1, 1]} : vector<8x2xf32> to vector<8x1xf32>
    %76 = vector.extract_strided_slice %73 {offsets = [0, 128], sizes = [8, 128], strides = [1, 1]} : vector<8x384xf32> to vector<8x128xf32>
    %77 = vector.broadcast %75 : vector<8x1xf32> to vector<8x128xf32>
    %78 = arith.mulf %77, %76 : vector<8x128xf32>
    %79 = arith.addf %74, %78 : vector<8x128xf32>
    %80 = vector.extract_strided_slice %71 {offsets = [0, 1], sizes = [8, 1], strides = [1, 1]} : vector<8x2xf32> to vector<8x1xf32>
    %81 = vector.extract_strided_slice %73 {offsets = [0, 256], sizes = [8, 128], strides = [1, 1]} : vector<8x384xf32> to vector<8x128xf32>
    %82 = vector.broadcast %80 : vector<8x1xf32> to vector<8x128xf32>
    %83 = arith.mulf %82, %81 : vector<8x128xf32>
    %84 = arith.addf %79, %83 : vector<8x128xf32>
    %85 = arith.mulf %38, %84 : vector<8x128xf32>
    %c0_22 = arith.constant 0 : index
    %c0_23 = arith.constant 0 : index
    %86 = vector.load %arg5[%c0_22, %c0_23] : memref<128x128xf32, #tpu.memory_space<vmem>>, vector<128x128xf32>
    %cst_24 = arith.constant dense<0.000000e+00> : vector<8x128xf32>
    %87 = tpu.matmul %85, %86, %cst_24 {dimension_numbers = #tpu.dot_dimension_numbers<[1], [0], [0], [1], [0, 0, 1, 1], [], []>} : vector<8x128xf32>, vector<128x128xf32>, vector<8x128xf32> -> vector<8x128xf32>
    %c0_25 = arith.constant 0 : index
    %c0_26 = arith.constant 0 : index
    %88 = vector.load %arg6[%c0_25, %c0_26] : memref<1x128xf32, #tpu.memory_space<vmem>>, vector<1x128xf32>
    %89 = vector.broadcast %88 : vector<1x128xf32> to vector<8x128xf32>
    %90 = arith.addf %87, %89 : vector<8x128xf32>
    %91 = vector.extract_strided_slice %0 {offsets = [0, 128], sizes = [8, 128], strides = [1, 1]} : vector<8x256xf32> to vector<8x128xf32>
    %92 = vector.broadcast %21 : vector<8x1xf32> to vector<8x128xf32>
    %93 = arith.mulf %90, %92 : vector<8x128xf32>
    %94 = arith.addf %91, %93 : vector<8x128xf32>
    %c0_27 = arith.constant 0 : index
    %c0_28 = arith.constant 0 : index
    %95 = vector.load %arg7[%c0_27, %c0_28] : memref<8x128xf32, #tpu.memory_space<vmem>>, vector<8x128xf32>
    tpu.vector_store %arg7[%c0_27, %c0_28], %94 {strides = array<i32>} : memref<8x128xf32, #tpu.memory_space<vmem>>, vector<8x128xf32>,
    return
  }
  func.func @transform_0(%arg0: i32) -> i32 {
    %c0_i32 = arith.constant 0 : i32
    %c0_i32_0 = arith.constant 0 : i32
    return %c0_i32 : i32
  }
  func.func @transform_1(%arg0: i32) -> (i32, i32) {
    %c0_i32 = arith.constant 0 : i32
    %c0_i32_0 = arith.constant 0 : i32
    return %arg0, %c0_i32 : i32, i32
  }
  func.func @transform_2(%arg0: i32) -> (i32, i32) {
    %c0_i32 = arith.constant 0 : i32
    %c0_i32_0 = arith.constant 0 : i32
    %c0_i32_1 = arith.constant 0 : i32
    return %c0_i32, %c0_i32_0 : i32, i32
  }
  func.func @transform_3(%arg0: i32) -> (i32, i32) {
    %c0_i32 = arith.constant 0 : i32
    %c0_i32_0 = arith.constant 0 : i32
    %c0_i32_1 = arith.constant 0 : i32
    return %c0_i32, %c0_i32_0 : i32, i32
  }
  func.func @transform_4(%arg0: i32) -> (i32, i32) {
    %c0_i32 = arith.constant 0 : i32
    %c0_i32_0 = arith.constant 0 : i32
    %c0_i32_1 = arith.constant 0 : i32
    return %c0_i32, %c0_i32_0 : i32, i32
  }
  func.func @transform_5(%arg0: i32) -> (i32, i32) {
    %c0_i32 = arith.constant 0 : i32
    %c0_i32_0 = arith.constant 0 : i32
    %c0_i32_1 = arith.constant 0 : i32
    return %c0_i32, %c0_i32_0 : i32, i32
  }
  func.func @transform_6(%arg0: i32) -> (i32, i32) {
    %c0_i32 = arith.constant 0 : i32
    %c0_i32_0 = arith.constant 0 : i32
    return %arg0, %c0_i32 : i32, i32
  }
}

</mosaic_0001>

<llo_original>
// kernel: tpu_custom_call.1
$region0: #{tpu_custom_call.1}
  #allocation0 [shape = 'u32[]', space=smem, size = 0x4, offset = 0x4, fixed_abs, tag = 'smem constant byte address 0x4 - core index']
  #allocation1 [shape = 'u32[144,128]{1,0:T(1,128)}', space=vmem, size = 0x12000, scoped, tag = 'internal scratch']
  #allocation2 [shape = 'f32[1]{0:T(128)S(6)}', space=smem, size = 0x200, scoped, tag = 'scoped memory for tpu_custom_call.1']
  %s0 = inlined_call_operand.<no memory space> [shape: f32[1], index: 0, kind: input, shape index: {}]
  %s1 = inlined_call_operand.hbm [shape: f32[8,256], index: 1, kind: input, shape index: {}]
  %s2 = inlined_call_operand.hbm [shape: f32[256,256], index: 2, kind: input, shape index: {}]
  %s3 = inlined_call_operand.hbm [shape: f32[128,384], index: 3, kind: input, shape index: {}]
  %s4 = inlined_call_operand.hbm [shape: f32[128,128], index: 4, kind: input, shape index: {}]
  %s5 = inlined_call_operand.vmem [shape: f32[1,128], index: 5, kind: input, shape index: {}]
  %s6 = inlined_call_operand.hbm [shape: f32[8,128], index: 6, kind: output, shape index: {}]
  %s7 = sld [smem:[#allocation0]]
  $region50: #{tpu_custom_call.1} parent=0
    _
  %s9 = ssub.s32 1, %s7
  %s10 = scalar_select 0, %s9, %s7
  %11 = sst [smem:[#allocation2]] %s0
  $region1: #{tpu_custom_call.1} parent=0
    #allocation3 [shape = 'u8[8192]{0}', space=vmem, size = 0x2000, scoped, tag = 'input window, operand 1, single buffered']
    #allocation4 [shape = 's32[1]{0}', space=sflag, size = 0x4, scoped, tag = 'scoped memory for tpu_custom_call.1']
    #allocation5 [shape = 's32[1]{0}', space=sflag, size = 0x4, scoped, tag = 'scoped memory for tpu_custom_call.1']
    #allocation6 [shape = 'u8[262144]{0}', space=vmem, size = 0x40000, scoped, tag = 'input window, operand 2, single buffered']
    #allocation7 [shape = 's32[1]{0}', space=sflag, size = 0x4, scoped, tag = 'scoped memory for tpu_custom_call.1']
    #allocation8 [shape = 'u8[196608]{0}', space=vmem, size = 0x30000, scoped, tag = 'input window, operand 3, single buffered']
    #allocation9 [shape = 'u8[65536]{0}', space=vmem, size = 0x10000, scoped, tag = 'input window, operand 4, single buffered']
    #allocation10 [shape = 's32[1]{0}', space=sflag, size = 0x4, scoped, tag = 'scoped memory for tpu_custom_call.1']
    #allocation11 [shape = 'u8[4096]{0}', space=vmem, size = 0x1000, scoped, tag = 'output window, operand 0, single buffered']
    %12 = vsyncpa [#allocation4], 0
    %13 = vsyncpa [#allocation7], 0
    %14 = vsyncpa [#allocation10], 0
    %15 = vsyncpa [#allocation5], 0
    // Predicated region
    $region2: #{tpu_custom_call.1} parent=1 // pred_check
      _
    $region3: #{tpu_custom_call.1} parent=1 // pred_check_branch
      %17 = sbr.rel (0) target = $region5
    $region4: #{tpu_custom_call.1} parent=1 // pred_region
      _
    $region5: #{tpu_custom_call.1} parent=1 // pred_fallthru
      _
    // Predicated region
    $region6: #{tpu_custom_call.1} parent=1 // pred_check
      _
    $region7: #{tpu_custom_call.1} parent=1 // pred_check_branch
      %19 = sbr.rel (0) target = $region9
    $region8: #{tpu_custom_call.1} parent=1 // pred_region
      %s21 = ssub.s32 256, 256
      %22 = vsyncadd [#allocation4], %s21
      %s24 = sshll.u32 [#allocation3], 4
      %s25 = int_to_ptr.vmem [resolvable:$true] %s24
      %27 = dma.hbm_to_vmem [thread:$0]  %s1, 256, %s25, [#allocation4]
    $region9: #{tpu_custom_call.1} parent=1 // pred_fallthru
      _
    // Predicated region
    $region10: #{tpu_custom_call.1} parent=1 // pred_check
      _
    $region11: #{tpu_custom_call.1} parent=1 // pred_check_branch
      %29 = sbr.rel (0) target = $region13
    $region12: #{tpu_custom_call.1} parent=1 // pred_region
      %s31 = ssub.s32 8192, 8192
      %32 = vsyncadd [#allocation7], %s31
      %s33 = sshll.u32 [#allocation6], 4
      %s34 = int_to_ptr.vmem [resolvable:$true] %s33
      %39 = dma.hbm_to_vmem [thread:$0]  %s2, 8192, %s34, [#allocation7], 256, 256, 16
    $region13: #{tpu_custom_call.1} parent=1 // pred_fallthru
      _
    // Predicated region
    $region14: #{tpu_custom_call.1} parent=1 // pred_check
      _
    $region15: #{tpu_custom_call.1} parent=1 // pred_check_branch
      %41 = sbr.rel (0) target = $region17
    $region16: #{tpu_custom_call.1} parent=1 // pred_region
      %s43 = ssub.s32 6144, 6144
      %44 = vsyncadd [#allocation7], %s43
      %s45 = sshll.u32 [#allocation8], 4
      %s46 = int_to_ptr.vmem [resolvable:$true] %s45
      %51 = dma.hbm_to_vmem [thread:$0]  %s3, 6144, %s46, [#allocation7], 384, 384, 24
    $region17: #{tpu_custom_call.1} parent=1 // pred_fallthru
      _
    // Predicated region
    $region18: #{tpu_custom_call.1} parent=1 // pred_check
      _
    $region19: #{tpu_custom_call.1} parent=1 // pred_check_branch
      %53 = sbr.rel (0) target = $region21
    $region20: #{tpu_custom_call.1} parent=1 // pred_region
      %s55 = ssub.s32 2048, 2048
      %56 = vsyncadd [#allocation10], %s55
      %s57 = sshll.u32 [#allocation9], 4
      %s58 = int_to_ptr.vmem [resolvable:$true] %s57
      %63 = dma.hbm_to_vmem [thread:$0]  %s4, 2048, %s58, [#allocation10], 128, 128, 8
    $region21: #{tpu_custom_call.1} parent=1 // pred_fallthru
      _
    // Predicated region
    $region22: #{tpu_custom_call.1} parent=1 // pred_check
      _
    $region23: #{tpu_custom_call.1} parent=1 // pred_check_branch
      %65 = sbr.rel (0) target = $region25
    $region24: #{tpu_custom_call.1} parent=1 // pred_region
      _
    $region25: #{tpu_custom_call.1} parent=1 // pred_fallthru
      _
    // Predicated region
    $region26: #{tpu_custom_call.1} parent=1 // pred_check
      _
    $region27: #{tpu_custom_call.1} parent=1 // pred_check_branch
      %67 = sbr.rel (0) target = $region29
    $region28: #{tpu_custom_call.1} parent=1 // pred_region
      %68 = dma.done [#allocation4], 256
    $region29: #{tpu_custom_call.1} parent=1 // pred_fallthru
      _
    // Predicated region
    $region30: #{tpu_custom_call.1} parent=1 // pred_check
      _
    $region31: #{tpu_custom_call.1} parent=1 // pred_check_branch
      %70 = sbr.rel (0) target = $region33
    $region32: #{tpu_custom_call.1} parent=1 // pred_region
      %71 = dma.done [#allocation7], 8192
    $region33: #{tpu_custom_call.1} parent=1 // pred_fallthru
      _
    // Predicated region
    $region34: #{tpu_custom_call.1} parent=1 // pred_check
      _
    $region35: #{tpu_custom_call.1} parent=1 // pred_check_branch
      %73 = sbr.rel (0) target = $region37
    $region36: #{tpu_custom_call.1} parent=1 // pred_region
      %74 = dma.done [#allocation7], 6144
    $region37: #{tpu_custom_call.1} parent=1 // pred_fallthru
      _
    // Predicated region
    $region38: #{tpu_custom_call.1} parent=1 // pred_check
      _
    $region39: #{tpu_custom_call.1} parent=1 // pred_check_branch
      %76 = sbr.rel (0) target = $region41
    $region40: #{tpu_custom_call.1} parent=1 // pred_region
      %77 = dma.done [#allocation10], 2048
    $region41: #{tpu_custom_call.1} parent=1 // pred_fallthru
      _
    %v78 = vld [vmem:[#allocation3] sm:$0xff]
    %v79 = vld [vmem:[#allocation3 + $0x8] sm:$0xff]
    %80 = vadd.xlane.f32.xlu0 %v78
    %v81 = vpop.xlane.xlu0 %80
    %v82 = vsub.f32 %v81, 1.0
    %v83 = vmul.f32 %v82, 0.03125
    %v84 = vmul.f32 %v78, %v78
    %85 = vadd.xlane.f32.xlu0 %v84
    %v86 = vpop.xlane.xlu0 %85
    %v87 = vsub.f32 %v86, 1.0
    %v88 = vmul.f32 %v87, 0.03125
    %v89 = vmul.f32 %v83, %v83
    %v90 = vsub.f32 %v88, %v89
    %v91 = vmax.f32 %v90, 0.0
    %v92 = vadd.f32 %v91, 1e-08
    %v93 = vrsqrt.pop %v92
    %v94 = vmul.f32 %v92, %v93
    %vm95 = vcmp.eq.f32.partialorder %v92, inf
    %v96 = vsel %vm95, %v92, %v94
    %vm97 = vcmp.eq.f32.partialorder %v92, 0.0
    %v98 = vand.u32 %v92, 2147483648
    %v99 = vsel %vm97, %v98, %v96
    %v100 = vrcp.pop %v99
    %v101 = vmul.f32 1.0, %v100
    %v102 = vlaneseq
    %v103 = vand.u32 %v102, 127
    %v104 = vadd.s32 %v103, 128
    %vm105 = vcmp.ge.s32.totalorder %v103, 128
    %vm106 = vcmp.ge.s32.totalorder %v104, 128
    %vm107 = vcmp.lt.s32.totalorder %v103, 144
    %vm108 = vcmp.lt.s32.totalorder %v104, 144
    %vm109 = vmand %vm105, %vm107
    %vm110 = vmand %vm106, %vm108
    %v111 = vsub.f32 %v78, %v83
    %v112 = vsub.f32 %v79, %v83
    %v113 = vmul.f32 %v111, %v101
    %v114 = vmul.f32 %v112, %v101
    %v115 = vsel %vm109, %v113, %v78
    %v116 = vsel %vm110, %v114, %v79
    %v117 = vld [vmem:[#allocation6] sm:$0xff]
    %v118 = vld [vmem:[#allocation6 + $0x8] sm:$0xff]
    %v119 = vld [vmem:[#allocation6 + $0x10] sm:$0xff]
    %v120 = vld [vmem:[#allocation6 + $0x18] sm:$0xff]
    %v121 = vld [vmem:[#allocation6 + $0x20] sm:$0xff]
    %v122 = vld [vmem:[#allocation6 + $0x28] sm:$0xff]
    %v123 = vld [vmem:[#allocation6 + $0x30] sm:$0xff]
    %v124 = vld [vmem:[#allocation6 + $0x38] sm:$0xff]
    %v125 = vld [vmem:[#allocation6 + $0x40] sm:$0xff]
    %v126 = vld [vmem:[#allocation6 + $0x48] sm:$0xff]
    %v127 = vld [vmem:[#allocation6 + $0x50] sm:$0xff]
    %v128 = vld [vmem:[#allocation6 + $0x58] sm:$0xff]
    %v129 = vld [vmem:[#allocation6 + $0x60] sm:$0xff]
    %v130 = vld [vmem:[#allocation6 + $0x68] sm:$0xff]
    %v131 = vld [vmem:[#allocation6 + $0x70] sm:$0xff]
    %v132 = vld [vmem:[#allocation6 + $0x78] sm:$0xff]
    %v133 = vld [vmem:[#allocation6 + $0x80] sm:$0xff]
    %v134 = vld [vmem:[#allocation6 + $0x88] sm:$0xff]
    %v135 = vld [vmem:[#allocation6 + $0x90] sm:$0xff]
    %v136 = vld [vmem:[#allocation6 + $0x98] sm:$0xff]
    %v137 = vld [vmem:[#allocation6 + $0xa0] sm:$0xff]
    %v138 = vld [vmem:[#allocation6 + $0xa8] sm:$0xff]
    %v139 = vld [vmem:[#allocation6 + $0xb0] sm:$0xff]
    %v140 = vld [vmem:[#allocation6 + $0xb8] sm:$0xff]
    %v141 = vld [vmem:[#allocation6 + $0xc0] sm:$0xff]
    %v142 = vld [vmem:[#allocation6 + $0xc8] sm:$0xff]
    %v143 = vld [vmem:[#allocation6 + $0xd0] sm:$0xff]
    %v144 = vld [vmem:[#allocation6 + $0xd8] sm:$0xff]
    %v145 = vld [vmem:[#allocation6 + $0xe0] sm:$0xff]
    %v146 = vld [vmem:[#allocation6 + $0xe8] sm:$0xff]
    %v147 = vld [vmem:[#allocation6 + $0xf0] sm:$0xff]
    %v148 = vld [vmem:[#allocation6 + $0xf8] sm:$0xff]
    %v149 = vld [vmem:[#allocation6 + $0x100] sm:$0xff]
    %v150 = vld [vmem:[#allocation6 + $0x108] sm:$0xff]
    %v151 = vld [vmem:[#allocation6 + $0x110] sm:$0xff]
    %v152 = vld [vmem:[#allocation6 + $0x118] sm:$0xff]
    %v153 = vld [vmem:[#allocation6 + $0x120] sm:$0xff]
    %v154 = vld [vmem:[#allocation6 + $0x128] sm:$0xff]
    %v155 = vld [vmem:[#allocation6 + $0x130] sm:$0xff]
    %v156 = vld [vmem:[#allocation6 + $0x138] sm:$0xff]
    %v157 = vld [vmem:[#allocation6 + $0x140] sm:$0xff]
    %v158 = vld [vmem:[#allocation6 + $0x148] sm:$0xff]
    %v159 = vld [vmem:[#allocation6 + $0x150] sm:$0xff]
    %v160 = vld [vmem:[#allocation6 + $0x158] sm:$0xff]
    %v161 = vld [vmem:[#allocation6 + $0x160] sm:$0xff]
    %v162 = vld [vmem:[#allocation6 + $0x168] sm:$0xff]
    %v163 = vld [vmem:[#allocation6 + $0x170] sm:$0xff]
    %v164 = vld [vmem:[#allocation6 + $0x178] sm:$0xff]
    %v165 = vld [vmem:[#allocation6 + $0x180] sm:$0xff]
    %v166 = vld [vmem:[#allocation6 + $0x188] sm:$0xff]
    %v167 = vld [vmem:[#allocation6 + $0x190] sm:$0xff]
    %v168 = vld [vmem:[#allocation6 + $0x198] sm:$0xff]
    %v169 = vld [vmem:[#allocation6 + $0x1a0] sm:$0xff]
    %v170 = vld [vmem:[#allocation6 + $0x1a8] sm:$0xff]
    %v171 = vld [vmem:[#allocation6 + $0x1b0] sm:$0xff]
    %v172 = vld [vmem:[#allocation6 + $0x1b8] sm:$0xff]
    %v173 = vld [vmem:[#allocation6 + $0x1c0] sm:$0xff]
    %v174 = vld [vmem:[#allocation6 + $0x1c8] sm:$0xff]
    %v175 = vld [vmem:[#allocation6 + $0x1d0] sm:$0xff]
    %v176 = vld [vmem:[#allocation6 + $0x1d8] sm:$0xff]
    %v177 = vld [vmem:[#allocation6 + $0x1e0] sm:$0xff]
    %v178 = vld [vmem:[#allocation6 + $0x1e8] sm:$0xff]
    %v179 = vld [vmem:[#allocation6 + $0x1f0] sm:$0xff]
    %v180 = vld [vmem:[#allocation6 + $0x1f8] sm:$0xff]
    %181 = vmatprep.subr.mxu0 %v118
    %182 = vmatpush1.msra.mxu0 %v117
    %183 = vmatprep.subr.mxu0 %v120
    %184 = vmatpush1.msra.mxu0 %v119
    %185 = vmatprep.subr.mxu0 %v122
    %186 = vmatpush1.msra.mxu0 %v121
    %187 = vmatprep.subr.mxu0 %v124
    %188 = vmatpush1.msra.mxu0 %v123
    %189 = vmatprep.subr.mxu0 %v126
    %190 = vmatpush1.msra.mxu0 %v125
    %191 = vmatprep.subr.mxu0 %v128
    %192 = vmatpush1.msra.mxu0 %v127
    %193 = vmatprep.subr.mxu0 %v130
    %194 = vmatpush1.msra.mxu0 %v129
    %195 = vmatprep.subr.mxu0 %v132
    %196 = vmatpush1.msra.mxu0 %v131
    %197 = vmatprep.subr.mxu0 %v134
    %198 = vmatpush1.msra.mxu0 %v133
    %199 = vmatprep.subr.mxu0 %v136
    %200 = vmatpush1.msra.mxu0 %v135
    %201 = vmatprep.subr.mxu0 %v138
    %202 = vmatpush1.msra.mxu0 %v137
    %203 = vmatprep.subr.mxu0 %v140
    %204 = vmatpush1.msra.mxu0 %v139
    %205 = vmatprep.subr.mxu0 %v142
    %206 = vmatpush1.msra.mxu0 %v141
    %207 = vmatprep.subr.mxu0 %v144
    %208 = vmatpush1.msra.mxu0 %v143
    %209 = vmatprep.subr.mxu0 %v146
    %210 = vmatpush1.msra.mxu0 %v145
    %211 = vmatprep.subr.mxu0 %v148
    %212 = vmatpush1.msra.mxu0 %v147
    %213 = vmatprep.subr.mxu0 %v150
    %214 = vmatpush1.msra.mxu0 %v149
    %215 = vmatprep.subr.mxu0 %v152
    %216 = vmatpush1.msra.mxu0 %v151
    %217 = vmatprep.subr.mxu0 %v154
    %218 = vmatpush1.msra.mxu0 %v153
    %219 = vmatprep.subr.mxu0 %v156
    %220 = vmatpush1.msra.mxu0 %v155
    %221 = vmatprep.subr.mxu0 %v158
    %222 = vmatpush1.msra.mxu0 %v157
    %223 = vmatprep.subr.mxu0 %v160
    %224 = vmatpush1.msra.mxu0 %v159
    %225 = vmatprep.subr.mxu0 %v162
    %226 = vmatpush1.msra.mxu0 %v161
    %227 = vmatprep.subr.mxu0 %v164
    %228 = vmatpush1.msra.mxu0 %v163
    %229 = vmatprep.subr.mxu0 %v166
    %230 = vmatpush1.msra.mxu0 %v165
    %231 = vmatprep.subr.mxu0 %v168
    %232 = vmatpush1.msra.mxu0 %v167
    %233 = vmatprep.subr.mxu0 %v170
    %234 = vmatpush1.msra.mxu0 %v169
    %235 = vmatprep.subr.mxu0 %v172
    %236 = vmatpush1.msra.mxu0 %v171
    %237 = vmatprep.subr.mxu0 %v174
    %238 = vmatpush1.msra.mxu0 %v173
    %239 = vmatprep.subr.mxu0 %v176
    %240 = vmatpush1.msra.mxu0 %v175
    %241 = vmatprep.subr.mxu0 %v178
    %242 = vmatpush1.msra.mxu0 %v177
    %243 = vmatprep.subr.mxu0 %v180
    %244 = vmatpush1.msra.mxu0 %v179
    %245 = vmatprep.mubr.f32.mxu0 %v116
    %246 = vmatmul.mubr.f32.gmra.mrb[0].mxu0 %v115
    %v247 = vpop.f32.mrb[0].mxu0
    %v248 = vadd.f32 0.0, %v247
    %v249 = vpop.f32.mrb[0].mxu0
    %v250 = vadd.f32 0.0, %v249
    %251 = vdwg.mxu0
    %252 = vmax.xlane.f32.xlu0 %v248
    %v253 = vpop.xlane.xlu0 %252
    %v254 = vsub.f32 %v248, %v253
    %v255 = vmul.f32 %v254, 1.442695
    %v256 = vpow.pop %v255
    %257 = vadd.xlane.f32.xlu0 %v256
    %v258 = vpop.xlane.xlu0 %257
    %v259 = vrcp.pop %v258
    %v260 = vmul.f32 1.0, %v259
    %v261 = vmul.f32 %v256, %v260
    %s262 = sld [smem:[#allocation2]]
    %v263 = vand.u32 2147483647, %v79
    %v264 = vstv %s262
    %v265 = vmul.f32 %v263, %v264
    %vm266 = vcmask 408960
    %v267 = vsel %vm266, %v265, -inf
    %268 = vmax.xlane.f32.xlu0 %v267
    %v269 = vpop.xlane.xlu0 %268
    %v270 = vmax.f32 %v269, %v264
    %v271 = vsub.f32 %v265, %v270
    %v272 = vmul.f32 %v271, 1.442695
    %v273 = vpow.pop %v272
    %v274 = vsub.f32 %v264, %v270
    %v275 = vmul.f32 %v274, 1.442695
    %v276 = vpow.pop %v275
    %278 = vrot.lane.b32.xlu0 %v273, 80
    %v279 = vpop.permute.xlu0 %278
    %vm281 = vcmask 15360
    %v282 = vsel %vm281, %v279, 0.0
    %283 = vadd.xlane.f32.xlu0 %v282
    %v284 = vpop.xlane.xlu0 %283
    %v285 = vadd.f32 %v276, %v284
    %v286 = vrcp.pop %v285
    %v287 = vmul.f32 1.0, %v286
    %v288 = vmul.f32 %v273, %v287
    %v289 = vld [vmem:[#allocation8] sm:$0xff]
    %v290 = vld [vmem:[#allocation8 + $0x8] sm:$0xff]
    %v291 = vld [vmem:[#allocation8 + $0x10] sm:$0xff]
    %v292 = vld [vmem:[#allocation8 + $0x18] sm:$0xff]
    %v293 = vld [vmem:[#allocation8 + $0x20] sm:$0xff]
    %v294 = vld [vmem:[#allocation8 + $0x28] sm:$0xff]
    %v295 = vld [vmem:[#allocation8 + $0x30] sm:$0xff]
    %v296 = vld [vmem:[#allocation8 + $0x38] sm:$0xff]
    %v297 = vld [vmem:[#allocation8 + $0x40] sm:$0xff]
    %v298 = vld [vmem:[#allocation8 + $0x48] sm:$0xff]
    %v299 = vld [vmem:[#allocation8 + $0x50] sm:$0xff]
    %v300 = vld [vmem:[#allocation8 + $0x58] sm:$0xff]
    %v301 = vld [vmem:[#allocation8 + $0x60] sm:$0xff]
    %v302 = vld [vmem:[#allocation8 + $0x68] sm:$0xff]
    %v303 = vld [vmem:[#allocation8 + $0x70] sm:$0xff]
    %v304 = vld [vmem:[#allocation8 + $0x78] sm:$0xff]
    %v305 = vld [vmem:[#allocation8 + $0x80] sm:$0xff]
    %v306 = vld [vmem:[#allocation8 + $0x88] sm:$0xff]
    %v307 = vld [vmem:[#allocation8 + $0x90] sm:$0xff]
    %v308 = vld [vmem:[#allocation8 + $0x98] sm:$0xff]
    %v309 = vld [vmem:[#allocation8 + $0xa0] sm:$0xff]
    %v310 = vld [vmem:[#allocation8 + $0xa8] sm:$0xff]
    %v311 = vld [vmem:[#allocation8 + $0xb0] sm:$0xff]
    %v312 = vld [vmem:[#allocation8 + $0xb8] sm:$0xff]
    %v313 = vld [vmem:[#allocation8 + $0xc0] sm:$0xff]
    %v314 = vld [vmem:[#allocation8 + $0xc8] sm:$0xff]
    %v315 = vld [vmem:[#allocation8 + $0xd0] sm:$0xff]
    %v316 = vld [vmem:[#allocation8 + $0xd8] sm:$0xff]
    %v317 = vld [vmem:[#allocation8 + $0xe0] sm:$0xff]
    %v318 = vld [vmem:[#allocation8 + $0xe8] sm:$0xff]
    %v319 = vld [vmem:[#allocation8 + $0xf0] sm:$0xff]
    %v320 = vld [vmem:[#allocation8 + $0xf8] sm:$0xff]
    %v321 = vld [vmem:[#allocation8 + $0x100] sm:$0xff]
    %v322 = vld [vmem:[#allocation8 + $0x108] sm:$0xff]
    %v323 = vld [vmem:[#allocation8 + $0x110] sm:$0xff]
    %v324 = vld [vmem:[#allocation8 + $0x118] sm:$0xff]
    %v325 = vld [vmem:[#allocation8 + $0x120] sm:$0xff]
    %v326 = vld [vmem:[#allocation8 + $0x128] sm:$0xff]
    %v327 = vld [vmem:[#allocation8 + $0x130] sm:$0xff]
    %v328 = vld [vmem:[#allocation8 + $0x138] sm:$0xff]
    %v329 = vld [vmem:[#allocation8 + $0x140] sm:$0xff]
    %v330 = vld [vmem:[#allocation8 + $0x148] sm:$0xff]
    %v331 = vld [vmem:[#allocation8 + $0x150] sm:$0xff]
    %v332 = vld [vmem:[#allocation8 + $0x158] sm:$0xff]
    %v333 = vld [vmem:[#allocation8 + $0x160] sm:$0xff]
    %v334 = vld [vmem:[#allocation8 + $0x168] sm:$0xff]
    %v335 = vld [vmem:[#allocation8 + $0x170] sm:$0xff]
    %v336 = vld [vmem:[#allocation8 + $0x178] sm:$0xff]
    %337 = vmatprep.subr.mxu0 %v290
    %338 = vmatpush1.msra.mxu0 %v289
    %339 = vmatprep.subr.mxu0 %v293
    %340 = vmatpush1.msra.mxu0 %v292
    %341 = vmatprep.subr.mxu0 %v296
    %342 = vmatpush1.msra.mxu0 %v295
    %343 = vmatprep.subr.mxu0 %v299
    %344 = vmatpush1.msra.mxu0 %v298
    %345 = vmatprep.subr.mxu0 %v302
    %346 = vmatpush1.msra.mxu0 %v301
    %347 = vmatprep.subr.mxu0 %v305
    %348 = vmatpush1.msra.mxu0 %v304
    %349 = vmatprep.subr.mxu0 %v308
    %350 = vmatpush1.msra.mxu0 %v307
    %351 = vmatprep.subr.mxu0 %v311
    %352 = vmatpush1.msra.mxu0 %v310
    %353 = vmatprep.subr.mxu0 %v314
    %354 = vmatpush1.msra.mxu0 %v313
    %355 = vmatprep.subr.mxu0 %v317
    %356 = vmatpush1.msra.mxu0 %v316
    %357 = vmatprep.subr.mxu0 %v320
    %358 = vmatpush1.msra.mxu0 %v319
    %359 = vmatprep.subr.mxu0 %v323
    %360 = vmatpush1.msra.mxu0 %v322
    %361 = vmatprep.subr.mxu0 %v326
    %362 = vmatpush1.msra.mxu0 %v325
    %363 = vmatprep.subr.mxu0 %v329
    %364 = vmatpush1.msra.mxu0 %v328
    %365 = vmatprep.subr.mxu0 %v332
    %366 = vmatpush1.msra.mxu0 %v331
    %367 = vmatprep.subr.mxu0 %v335
    %368 = vmatpush1.msra.mxu0 %v334
    %369 = vmatprep.subr.mxu0 0.0
    %370 = vmatpush1.msra.mxu0 0.0
    %371 = vmatprep.subr.mxu0 0.0
    %372 = vmatpush1.msra.mxu0 0.0
    %373 = vmatprep.subr.mxu0 0.0
    %374 = vmatpush1.msra.mxu0 0.0
    %375 = vmatprep.subr.mxu0 0.0
    %376 = vmatpush1.msra.mxu0 0.0
    %377 = vmatprep.subr.mxu0 0.0
    %378 = vmatpush1.msra.mxu0 0.0
    %379 = vmatprep.subr.mxu0 0.0
    %380 = vmatpush1.msra.mxu0 0.0
    %381 = vmatprep.subr.mxu0 0.0
    %382 = vmatpush1.msra.mxu0 0.0
    %383 = vmatprep.subr.mxu0 0.0
    %384 = vmatpush1.msra.mxu0 0.0
    %385 = vmatprep.subr.mxu0 0.0
    %386 = vmatpush1.msra.mxu0 0.0
    %387 = vmatprep.subr.mxu0 0.0
    %388 = vmatpush1.msra.mxu0 0.0
    %389 = vmatprep.subr.mxu0 0.0
    %390 = vmatpush1.msra.mxu0 0.0
    %391 = vmatprep.subr.mxu0 0.0
    %392 = vmatpush1.msra.mxu0 0.0
    %393 = vmatprep.subr.mxu0 0.0
    %394 = vmatpush1.msra.mxu0 0.0
    %395 = vmatprep.subr.mxu0 0.0
    %396 = vmatpush1.msra.mxu0 0.0
    %397 = vmatprep.subr.mxu0 0.0
    %398 = vmatpush1.msra.mxu0 0.0
    %399 = vmatprep.subr.mxu0 0.0
    %400 = vmatpush1.msra.mxu0 0.0
    %401 = vmatprep.mubr.f32.mxu0 0.0
    %402 = vmatmul.mubr.f32.gmra.mrb[0].mxu0 %v261
    %v403 = vpop.f32.mrb[0].mxu0
    %v404 = vadd.f32 0.0, %v403
    %v405 = vpop.f32.mrb[0].mxu0
    %v406 = vadd.f32 0.0, %v405
    %407 = vdwg.mxu0
    %408 = vmatprep.subr.mxu0 0.0
    %409 = vmatpush1.msra.mxu0 %v291
    %410 = vmatprep.subr.mxu0 0.0
    %411 = vmatpush1.msra.mxu0 %v294
    %412 = vmatprep.subr.mxu0 0.0
    %413 = vmatpush1.msra.mxu0 %v297
    %414 = vmatprep.subr.mxu0 0.0
    %415 = vmatpush1.msra.mxu0 %v300
    %416 = vmatprep.subr.mxu0 0.0
    %417 = vmatpush1.msra.mxu0 %v303
    %418 = vmatprep.subr.mxu0 0.0
    %419 = vmatpush1.msra.mxu0 %v306
    %420 = vmatprep.subr.mxu0 0.0
    %421 = vmatpush1.msra.mxu0 %v309
    %422 = vmatprep.subr.mxu0 0.0
    %423 = vmatpush1.msra.mxu0 %v312
    %424 = vmatprep.subr.mxu0 0.0
    %425 = vmatpush1.msra.mxu0 %v315
    %426 = vmatprep.subr.mxu0 0.0
    %427 = vmatpush1.msra.mxu0 %v318
    %428 = vmatprep.subr.mxu0 0.0
    %429 = vmatpush1.msra.mxu0 %v321
    %430 = vmatprep.subr.mxu0 0.0
    %431 = vmatpush1.msra.mxu0 %v324
    %432 = vmatprep.subr.mxu0 0.0
    %433 = vmatpush1.msra.mxu0 %v327
    %434 = vmatprep.subr.mxu0 0.0
    %435 = vmatpush1.msra.mxu0 %v330
    %436 = vmatprep.subr.mxu0 0.0
    %437 = vmatpush1.msra.mxu0 %v333
    %438 = vmatprep.subr.mxu0 0.0
    %439 = vmatpush1.msra.mxu0 %v336
    %440 = vmatprep.subr.mxu0 0.0
    %441 = vmatpush1.msra.mxu0 0.0
    %442 = vmatprep.subr.mxu0 0.0
    %443 = vmatpush1.msra.mxu0 0.0
    %444 = vmatprep.subr.mxu0 0.0
    %445 = vmatpush1.msra.mxu0 0.0
    %446 = vmatprep.subr.mxu0 0.0
    %447 = vmatpush1.msra.mxu0 0.0
    %448 = vmatprep.subr.mxu0 0.0
    %449 = vmatpush1.msra.mxu0 0.0
    %450 = vmatprep.subr.mxu0 0.0
    %451 = vmatpush1.msra.mxu0 0.0
    %452 = vmatprep.subr.mxu0 0.0
    %453 = vmatpush1.msra.mxu0 0.0
    %454 = vmatprep.subr.mxu0 0.0
    %455 = vmatpush1.msra.mxu0 0.0
    %456 = vmatprep.subr.mxu0 0.0
    %457 = vmatpush1.msra.mxu0 0.0
    %458 = vmatprep.subr.mxu0 0.0
    %459 = vmatpush1.msra.mxu0 0.0
    %460 = vmatprep.subr.mxu0 0.0
    %461 = vmatpush1.msra.mxu0 0.0
    %462 = vmatprep.subr.mxu0 0.0
    %463 = vmatpush1.msra.mxu0 0.0
    %464 = vmatprep.subr.mxu0 0.0
    %465 = vmatpush1.msra.mxu0 0.0
    %466 = vmatprep.subr.mxu0 0.0
    %467 = vmatpush1.msra.mxu0 0.0
    %468 = vmatprep.subr.mxu0 0.0
    %469 = vmatpush1.msra.mxu0 0.0
    %470 = vmatprep.subr.mxu0 0.0
    %471 = vmatpush1.msra.mxu0 0.0
    %472 = vmatprep.mubr.f32.mxu0 0.0
    %473 = vmatmul.mubr.f32.gmra.mrb[0].mxu0 %v261
    %v474 = vpop.f32.mrb[0].mxu0
    %v475 = vadd.f32 0.0, %v474
    %v476 = vpop.f32.mrb[0].mxu0
    %477 = vdwg.mxu0
    %479 = vset.pattern.permute.xlu0 48
    %480 = vperm.xlu0 %479, %v288
    %v481 = vpop.permute.xlu0 %480
    %v483 = vmul.f32 %v481, %v406
    %v484 = vadd.f32 %v404, %v483
    %485 = vset.pattern.permute.xlu0 49
    %486 = vperm.xlu0 %485, %v288
    %v487 = vpop.permute.xlu0 %486
    %v489 = vmul.f32 %v487, %v475
    %v490 = vadd.f32 %v484, %v489
    %v491 = vmul.f32 %v250, %v490
    %v492 = vld [vmem:[#allocation9] sm:$0xff]
    %v493 = vld [vmem:[#allocation9 + $0x8] sm:$0xff]
    %v494 = vld [vmem:[#allocation9 + $0x10] sm:$0xff]
    %v495 = vld [vmem:[#allocation9 + $0x18] sm:$0xff]
    %v496 = vld [vmem:[#allocation9 + $0x20] sm:$0xff]
    %v497 = vld [vmem:[#allocation9 + $0x28] sm:$0xff]
    %v498 = vld [vmem:[#allocation9 + $0x30] sm:$0xff]
    %v499 = vld [vmem:[#allocation9 + $0x38] sm:$0xff]
    %v500 = vld [vmem:[#allocation9 + $0x40] sm:$0xff]
    %v501 = vld [vmem:[#allocation9 + $0x48] sm:$0xff]
    %v502 = vld [vmem:[#allocation9 + $0x50] sm:$0xff]
    %v503 = vld [vmem:[#allocation9 + $0x58] sm:$0xff]
    %v504 = vld [vmem:[#allocation9 + $0x60] sm:$0xff]
    %v505 = vld [vmem:[#allocation9 + $0x68] sm:$0xff]
    %v506 = vld [vmem:[#allocation9 + $0x70] sm:$0xff]
    %v507 = vld [vmem:[#allocation9 + $0x78] sm:$0xff]
    %v508 = vld [vmem:[%s5] sm:$0x1]
    %v510 = vlaneseq
    %v511 = vshrl.u32 %v510, 7
    %v512 = vsub.s32 0, %v511
    %v513 = vrot.slane %v508, %v512
    %515 = vmatprep.subr.mxu0 0.0
    %516 = vmatpush1.msra.mxu0 %v492
    %517 = vmatprep.subr.mxu0 0.0
    %518 = vmatpush1.msra.mxu0 %v493
    %519 = vmatprep.subr.mxu0 0.0
    %520 = vmatpush1.msra.mxu0 %v494
    %521 = vmatprep.subr.mxu0 0.0
    %522 = vmatpush1.msra.mxu0 %v495
    %523 = vmatprep.subr.mxu0 0.0
    %524 = vmatpush1.msra.mxu0 %v496
    %525 = vmatprep.subr.mxu0 0.0
    %526 = vmatpush1.msra.mxu0 %v497
    %527 = vmatprep.subr.mxu0 0.0
    %528 = vmatpush1.msra.mxu0 %v498
    %529 = vmatprep.subr.mxu0 0.0
    %530 = vmatpush1.msra.mxu0 %v499
    %531 = vmatprep.subr.mxu0 0.0
    %532 = vmatpush1.msra.mxu0 %v500
    %533 = vmatprep.subr.mxu0 0.0
    %534 = vmatpush1.msra.mxu0 %v501
    %535 = vmatprep.subr.mxu0 0.0
    %536 = vmatpush1.msra.mxu0 %v502
    %537 = vmatprep.subr.mxu0 0.0
    %538 = vmatpush1.msra.mxu0 %v503
    %539 = vmatprep.subr.mxu0 0.0
    %540 = vmatpush1.msra.mxu0 %v504
    %541 = vmatprep.subr.mxu0 0.0
    %542 = vmatpush1.msra.mxu0 %v505
    %543 = vmatprep.subr.mxu0 0.0
    %544 = vmatpush1.msra.mxu0 %v506
    %545 = vmatprep.subr.mxu0 0.0
    %546 = vmatpush1.msra.mxu0 %v507
    %547 = vmatprep.subr.mxu0 0.0
    %548 = vmatpush1.msra.mxu0 0.0
    %549 = vmatprep.subr.mxu0 0.0
    %550 = vmatpush1.msra.mxu0 0.0
    %551 = vmatprep.subr.mxu0 0.0
    %552 = vmatpush1.msra.mxu0 0.0
    %553 = vmatprep.subr.mxu0 0.0
    %554 = vmatpush1.msra.mxu0 0.0
    %555 = vmatprep.subr.mxu0 0.0
    %556 = vmatpush1.msra.mxu0 0.0
    %557 = vmatprep.subr.mxu0 0.0
    %558 = vmatpush1.msra.mxu0 0.0
    %559 = vmatprep.subr.mxu0 0.0
    %560 = vmatpush1.msra.mxu0 0.0
    %561 = vmatprep.subr.mxu0 0.0
    %562 = vmatpush1.msra.mxu0 0.0
    %563 = vmatprep.subr.mxu0 0.0
    %564 = vmatpush1.msra.mxu0 0.0
    %565 = vmatprep.subr.mxu0 0.0
    %566 = vmatpush1.msra.mxu0 0.0
    %567 = vmatprep.subr.mxu0 0.0
    %568 = vmatpush1.msra.mxu0 0.0
    %569 = vmatprep.subr.mxu0 0.0
    %570 = vmatpush1.msra.mxu0 0.0
    %571 = vmatprep.subr.mxu0 0.0
    %572 = vmatpush1.msra.mxu0 0.0
    %573 = vmatprep.subr.mxu0 0.0
    %574 = vmatpush1.msra.mxu0 0.0
    %575 = vmatprep.subr.mxu0 0.0
    %576 = vmatpush1.msra.mxu0 0.0
    %577 = vmatprep.subr.mxu0 0.0
    %578 = vmatpush1.msra.mxu0 0.0
    %579 = vmatprep.mubr.f32.mxu0 0.0
    %580 = vmatmul.mubr.f32.gmra.mrb[0].mxu0 %v491
    %v581 = vpop.f32.mrb[0].mxu0
    %v582 = vadd.f32 %v513, %v581
    %v583 = vpop.f32.mrb[0].mxu0
    %584 = vdwg.mxu0
    %v585 = vmul.f32 %v582, %v99
    %v586 = vadd.f32 %v79, %v585
    %587 = vst [vmem:[#allocation11] sm:$0xff] %v586
    // Predicated region
    $region42: #{tpu_custom_call.1} parent=1 // pred_check
      _
    $region43: #{tpu_custom_call.1} parent=1 // pred_check_branch
      %589 = sbr.rel (0) target = $region45
    $region44: #{tpu_custom_call.1} parent=1 // pred_region
      %s591 = ssub.s32 128, 128
      %592 = vsyncadd [#allocation5], %s591
      %s594 = sshll.u32 [#allocation11], 4
      %s595 = int_to_ptr.vmem [resolvable:$true] %s594
      %597 = dma.vmem_to_hbm [thread:$0]  %s595, 128, %s6, [#allocation5]
    $region45: #{tpu_custom_call.1} parent=1 // pred_fallthru
      _
    // Predicated region
    $region46: #{tpu_custom_call.1} parent=1 // pred_check
      _
    $region47: #{tpu_custom_call.1} parent=1 // pred_check_branch
      %599 = sbr.rel (0) target = $region49
    $region48: #{tpu_custom_call.1} parent=1 // pred_region
      %600 = dma.done [#allocation5], 128
    $region49: #{tpu_custom_call.1} parent=1 // pred_fallthru
      _
    %601 = vsyncpa [#allocation4], 1
    %602 = vsyncpa [#allocation7], 1
    %603 = vsyncpa [#allocation10], 1
    %604 = vsyncpa [#allocation5], 1

</llo_original>
